<compile_context>
chip_gen: v6e
topology: v6e:2x2x1
jax: 0.10.0
libtpu: 0.0.40
codegen_flags: <defaults>
</compile_context>

<pallas_src>
import math
import functools

import jax
import jax.numpy as jnp
from jax import lax
from jax.experimental import pallas as pl
from jax.experimental.pallas import tpu as pltpu

_INV_SQRT2 = 1.0 / math.sqrt(2.0)


def _attn_pool_kernel(x_ref, w1_ref, b1_ref, g_ref, be_ref, w2_ref, b2_ref, o_ref):
    # x_ref: (TB, S, E); weights full-resident in VMEM; o_ref: (TB, E)
    TB, S, E = x_ref.shape
    x = x_ref[...]                                        # (TB, S, E)
    x32 = x.astype(jnp.float32)

    # --- Linear(E, E): tall-M matmul on the MXU, f32 accumulation ---
    x2 = x.reshape(TB * S, E)
    h = jnp.dot(x2.astype(w1_ref.dtype), w1_ref[...],
                preferred_element_type=jnp.float32) + b1_ref[...]     # (TB*S, E)

    # --- LayerNorm(E) (eps = 1e-5, elementwise affine), lane-axis reductions ---
    mean = jnp.mean(h, axis=-1, keepdims=True)
    var = jnp.mean((h - mean) ** 2, axis=-1, keepdims=True)
    h = (h - mean) * lax.rsqrt(var + 1e-5)
    h = h * g_ref[...] + be_ref[...]

    # --- GELU (exact erf form, torch default) ---
    h = 0.5 * h * (1.0 + lax.erf(h * _INV_SQRT2))

    # --- Linear(E, 1) as a VPU lane reduction (avoid N=1 MXU matmul) ---
    hw = (h * w2_ref[...]).reshape(TB, S, E)
    logits = jnp.sum(hw, axis=-1) + b2_ref[...]           # (TB, S), S on the lane axis

    # --- softmax over the sequence (lane axis) ---
    m = jnp.max(logits, axis=-1, keepdims=True)
    e = jnp.exp(logits - m)
    w = e / jnp.sum(e, axis=-1, keepdims=True)            # (TB, S)

    # --- weighted sum over the sequence: VPU multiply + sublane reduce ---
    pooled = jnp.sum(x32 * w[:, :, None], axis=1)         # (TB, E)
    o_ref[...] = pooled.astype(o_ref.dtype)


@functools.partial(jax.jit, static_argnames=("block_b",))
def attention_pooling(x, w1, b1, gamma, beta, w2, b2, *, block_b=8):
    """x: (B, S, E). w1: (E, E). b1/gamma/beta: (E,)-like. w2: (E, 1)-like. b2: scalar-like.

    Pass w1 in bfloat16 to run the first matmul in bf16 on the MXU (accumulation stays f32).
    """
    B, S, E = x.shape
    b1 = jnp.reshape(b1, (1, E)).astype(jnp.float32)
    gamma = jnp.reshape(gamma, (1, E)).astype(jnp.float32)
    beta = jnp.reshape(beta, (1, E)).astype(jnp.float32)
    w2_row = jnp.reshape(w2, (1, E)).astype(jnp.float32)   # pre-shaped: no in-kernel transpose
    b2 = jnp.reshape(b2, (1, 1)).astype(jnp.float32)

    TB = block_b if B >= block_b else B                    # TB==B when B < block_b (single block)
    Bp = int(pl.cdiv(B, TB)) * TB
    xp = x if Bp == B else jnp.pad(x, ((0, Bp - B), (0, 0), (0, 0)))

    # Advisory cost hint for the XLA scheduler.
    cost = pl.CostEstimate(
        flops=2 * Bp * S * E * E + 4 * Bp * S * E,
        transcendentals=Bp * S * (E + 1),
        bytes_accessed=(xp.size * xp.dtype.itemsize
                        + w1.size * w1.dtype.itemsize
                        + Bp * E * x.dtype.itemsize),
    )

    full2 = lambda b: (0, 0)
    out = pl.pallas_call(
        _attn_pool_kernel,
        out_shape=jax.ShapeDtypeStruct((Bp, E), x.dtype),
        grid_spec=pltpu.PrefetchScalarGridSpec(
            num_scalar_prefetch=0,
            grid=(Bp // TB,),
            in_specs=[
                pl.BlockSpec((TB, S, E), lambda b: (b, 0, 0)),   # x, TB batch rows per step
                pl.BlockSpec((E, E), full2),                     # W1 (f32 or bf16)
                pl.BlockSpec((1, E), full2),                     # b1
                pl.BlockSpec((1, E), full2),                     # LN gamma
                pl.BlockSpec((1, E), full2),                     # LN beta
                pl.BlockSpec((1, E), full2),                     # W2 as a row
                pl.BlockSpec((1, 1), full2),                     # b2
            ],
            out_specs=pl.BlockSpec((TB, E), lambda b: (b, 0)),   # lane-dense output slab
        ),
        compiler_params=pltpu.CompilerParams(
            dimension_semantics=("parallel",)),                  # megacore sharding on v7x
        cost_estimate=cost,
    )(xp, w1, b1, gamma, beta, w2_row, b2)
    return out[:B]


def reference(x, w1, b1, gamma, beta, w2, b2):
    """Pure-JAX reference of the PyTorch forward (mask=None)."""
    h = x @ w1 + b1
    mean = h.mean(-1, keepdims=True)
    var = ((h - mean) ** 2).mean(-1, keepdims=True)
    h = (h - mean) / jnp.sqrt(var + 1e-5) * gamma + beta
    h = 0.5 * h * (1.0 + lax.erf(h / math.sqrt(2.0)))
    logits = h @ w2 + b2                       # (B, S, 1)
    wts = jax.nn.softmax(logits, axis=1)       # softmax over sequence
    return (x * wts).sum(axis=1)               # (B, E)


if __name__ == "__main__":
    key = jax.random.PRNGKey(0)
    kx, k1, k2, k3, k4 = jax.random.split(key, 5)

    # --- main check: lane-aligned E, multiple grid steps ---
    B, S, E = 16, 8, 128
    x = jax.random.normal(kx, (B, S, E), dtype=jnp.float32)
    lim = 1.0 / math.sqrt(E)
    w1 = jax.random.uniform(k1, (E, E), minval=-lim, maxval=lim, dtype=jnp.float32)
    b1 = jax.random.uniform(k2, (E,), minval=-lim, maxval=lim, dtype=jnp.float32)
    gamma = jnp.ones((E,), dtype=jnp.float32)
    beta = jnp.zeros((E,), dtype=jnp.float32)
    w2 = jax.random.uniform(k3, (E, 1), minval=-lim, maxval=lim, dtype=jnp.float32)
    b2 = jax.random.uniform(k4, (1,), minval=-lim, maxval=lim, dtype=jnp.float32)

    out = jax.block_until_ready(attention_pooling(x, w1, b1, gamma, beta, w2, b2))
    ref = reference(x, w1, b1.reshape(1, E), gamma.reshape(1, E), beta.reshape(1, E), w2, b2)
    assert out.shape == (B, E), out.shape
    assert jnp.allclose(out, ref, atol=1e-5, rtol=1e-5), float(jnp.max(jnp.abs(out - ref)))

    # --- ragged-batch / small-E check (exercises batch padding path) ---
    B2, S2, E2 = 10, 8, 32
    x2 = jax.random.normal(kx, (B2, S2, E2), dtype=jnp.float32)
    lim2 = 1.0 / math.sqrt(E2)
    w1b = jax.random.uniform(k1, (E2, E2), minval=-lim2, maxval=lim2, dtype=jnp.float32)
    b1b = jax.random.uniform(k2, (E2,), minval=-lim2, maxval=lim2, dtype=jnp.float32)
    g2 = jnp.ones((E2,), dtype=jnp.float32)
    be2 = jnp.zeros((E2,), dtype=jnp.float32)
    w2b = jax.random.uniform(k3, (E2, 1), minval=-lim2, maxval=lim2, dtype=jnp.float32)
    b2b = jax.random.uniform(k4, (1,), minval=-lim2, maxval=lim2, dtype=jnp.float32)

    out2 = jax.block_until_ready(attention_pooling(x2, w1b, b1b, g2, be2, w2b, b2b))
    ref2 = reference(x2, w1b, b1b.reshape(1, E2), g2.reshape(1, E2), be2.reshape(1, E2), w2b, b2b)
    assert out2.shape == (B2, E2)
    assert jnp.allclose(out2, ref2, atol=1e-5, rtol=1e-5), float(jnp.max(jnp.abs(out2 - ref2)))

    # --- optional bf16-MXU path (halves W1 DMA bytes; LN/softmax/accum stay f32) ---
    out_bf16 = jax.block_until_ready(
        attention_pooling(x, w1.astype(jnp.bfloat16), b1, gamma, beta, w2, b2))
    assert out_bf16.shape == (B, E)
    assert bool(jnp.all(jnp.isfinite(out_bf16)))

    print("KERNEL_OK")
</pallas_src>

<mosaic_0001>
module attributes {stable_mosaic.version = 11 : i64} {
  func.func @_attn_pool_kernel(%arg0: i32, %arg1: memref<8x8x128xf32, #tpu.memory_space<vmem>>, %arg2: memref<128x128xf32, #tpu.memory_space<vmem>>, %arg3: memref<1x128xf32, #tpu.memory_space<vmem>>, %arg4: memref<1x128xf32, #tpu.memory_space<vmem>>, %arg5: memref<1x128xf32, #tpu.memory_space<vmem>>, %arg6: memref<1x128xf32, #tpu.memory_space<vmem>>, %arg7: memref<1x1xf32, #tpu.memory_space<vmem>>, %arg8: memref<8x128xf32, #tpu.memory_space<vmem>>) attributes {dimension_semantics = [#tpu.dimension_semantics<parallel>], iteration_bounds = array<i64: 2>, scalar_prefetch = 0 : i64, scratch_operands = 0 : i64, tpu.core_type = #tpu.core_type<tc>, window_params = [{transform_indices = @transform_0, window_bounds = array<i64: 8, 8, 128>}, {pipeline_mode = #tpu.pipeline_mode<synchronous>, transform_indices = @transform_1, window_bounds = array<i64: 128, 128>}, {pipeline_mode = #tpu.pipeline_mode<synchronous>, transform_indices = @transform_2, window_bounds = array<i64: 1, 128>}, {pipeline_mode = #tpu.pipeline_mode<synchronous>, transform_indices = @transform_3, window_bounds = array<i64: 1, 128>}, {pipeline_mode = #tpu.pipeline_mode<synchronous>, transform_indices = @transform_4, window_bounds = array<i64: 1, 128>}, {pipeline_mode = #tpu.pipeline_mode<synchronous>, transform_indices = @transform_5, window_bounds = array<i64: 1, 128>}, {pipeline_mode = #tpu.pipeline_mode<synchronous>, transform_indices = @transform_6, window_bounds = array<i64: 1, 1>}, {transform_indices = @transform_7, window_bounds = array<i64: 8, 128>}]} {
    %c0 = arith.constant 0 : index
    %c0_0 = arith.constant 0 : index
    %c0_1 = arith.constant 0 : index
    %0 = vector.load %arg1[%c0, %c0_0, %c0_1] : memref<8x8x128xf32, #tpu.memory_space<vmem>>, vector<8x8x128xf32>
    %1 = vector.shape_cast %0 : vector<8x8x128xf32> to vector<64x128xf32>
    %c0_2 = arith.constant 0 : index
    %c0_3 = arith.constant 0 : index
    %2 = vector.load %arg2[%c0_2, %c0_3] : memref<128x128xf32, #tpu.memory_space<vmem>>, vector<128x128xf32>
    %cst = arith.constant dense<0.000000e+00> : vector<64x128xf32>
    %3 = tpu.matmul %1, %2, %cst {dimension_numbers = #tpu.dot_dimension_numbers<[1], [0], [0], [1], [0, 0, 1, 1], [], []>} : vector<64x128xf32>, vector<128x128xf32>, vector<64x128xf32> -> vector<64x128xf32>
    %c0_4 = arith.constant 0 : index
    %c0_5 = arith.constant 0 : index
    %4 = vector.load %arg3[%c0_4, %c0_5] : memref<1x128xf32, #tpu.memory_space<vmem>>, vector<1x128xf32>
    %5 = vector.broadcast %4 : vector<1x128xf32> to vector<64x128xf32>
    %6 = arith.addf %3, %5 : vector<64x128xf32>
    %cst_6 = arith.constant dense<0.000000e+00> : vector<64xf32>
    %7 = vector.multi_reduction <add>, %6, %cst_6 [1] : vector<64x128xf32> to vector<64xf32>
    %8 = vector.shape_cast %7 : vector<64xf32> to vector<64x1xf32>
    %cst_7 = arith.constant 1.280000e+02 : f32
    %9 = vector.broadcast %cst_7 : f32 to vector<64x1xf32>
    %10 = arith.divf %8, %9 : vector<64x1xf32>
    %11 = vector.broadcast %10 : vector<64x1xf32> to vector<64x128xf32>
    %12 = arith.subf %6, %11 : vector<64x128xf32>
    %13 = arith.mulf %12, %12 : vector<64x128xf32>
    %cst_8 = arith.constant dense<0.000000e+00> : vector<64xf32>
    %14 = vector.multi_reduction <add>, %13, %cst_8 [1] : vector<64x128xf32> to vector<64xf32>
    %15 = vector.shape_cast %14 : vector<64xf32> to vector<64x1xf32>
    %cst_9 = arith.constant 1.280000e+02 : f32
    %16 = vector.broadcast %cst_9 : f32 to vector<64x1xf32>
    %17 = arith.divf %15, %16 : vector<64x1xf32>
    %18 = vector.broadcast %10 : vector<64x1xf32> to vector<64x128xf32>
    %19 = arith.subf %6, %18 : vector<64x128xf32>
    %cst_10 = arith.constant 9.99999974E-6 : f32
    %20 = vector.broadcast %cst_10 : f32 to vector<64x1xf32>
    %21 = arith.addf %17, %20 : vector<64x1xf32>
    %22 = math.rsqrt %21 : vector<64x1xf32>
    %23 = vector.broadcast %22 : vector<64x1xf32> to vector<64x128xf32>
    %24 = arith.mulf %19, %23 : vector<64x128xf32>
    %c0_11 = arith.constant 0 : index
    %c0_12 = arith.constant 0 : index
    %25 = vector.load %arg4[%c0_11, %c0_12] : memref<1x128xf32, #tpu.memory_space<vmem>>, vector<1x128xf32>
    %26 = vector.broadcast %25 : vector<1x128xf32> to vector<64x128xf32>
    %27 = arith.mulf %24, %26 : vector<64x128xf32>
    %c0_13 = arith.constant 0 : index
    %c0_14 = arith.constant 0 : index
    %28 = vector.load %arg5[%c0_13, %c0_14] : memref<1x128xf32, #tpu.memory_space<vmem>>, vector<1x128xf32>
    %29 = vector.broadcast %28 : vector<1x128xf32> to vector<64x128xf32>
    %30 = arith.addf %27, %29 : vector<64x128xf32>
    %cst_15 = arith.constant 5.000000e-01 : f32
    %31 = vector.broadcast %cst_15 : f32 to vector<64x128xf32>
    %32 = arith.mulf %31, %30 : vector<64x128xf32>
    %cst_16 = arith.constant 0.707106769 : f32
    %33 = vector.broadcast %cst_16 : f32 to vector<64x128xf32>
    %34 = arith.mulf %30, %33 : vector<64x128xf32>
    %35 = math.erf %34 : vector<64x128xf32>
    %cst_17 = arith.constant 1.000000e+00 : f32
    %36 = vector.broadcast %cst_17 : f32 to vector<64x128xf32>
    %37 = arith.addf %36, %35 : vector<64x128xf32>
    %38 = arith.mulf %32, %37 : vector<64x128xf32>
    %c0_18 = arith.constant 0 : index
    %c0_19 = arith.constant 0 : index
    %39 = vector.load %arg6[%c0_18, %c0_19] : memref<1x128xf32, #tpu.memory_space<vmem>>, vector<1x128xf32>
    %40 = vector.broadcast %39 : vector<1x128xf32> to vector<64x128xf32>
    %41 = arith.mulf %38, %40 : vector<64x128xf32>
    %42 = vector.shape_cast %41 : vector<64x128xf32> to vector<8x8x128xf32>
    %cst_20 = arith.constant dense<0.000000e+00> : vector<8x8xf32>
    %43 = vector.multi_reduction <add>, %42, %cst_20 [2] : vector<8x8x128xf32> to vector<8x8xf32>
    %c0_21 = arith.constant 0 : index
    %c0_22 = arith.constant 0 : index
    %44 = vector.load %arg7[%c0_21, %c0_22] : memref<1x1xf32, #tpu.memory_space<vmem>>, vector<1x1xf32>
    %45 = vector.broadcast %44 : vector<1x1xf32> to vector<8x8xf32>
    %46 = arith.addf %43, %45 : vector<8x8xf32>
    %cst_23 = arith.constant dense<0xFF800000> : vector<8xf32>
    %47 = vector.multi_reduction <maximumf>, %46, %cst_23 [1] : vector<8x8xf32> to vector<8xf32>
    %48 = vector.shape_cast %47 : vector<8xf32> to vector<8x1xf32>
    %49 = vector.broadcast %48 : vector<8x1xf32> to vector<8x8xf32>
    %50 = arith.subf %46, %49 : vector<8x8xf32>
    %51 = math.exp %50 : vector<8x8xf32>
    %cst_24 = arith.constant dense<0.000000e+00> : vector<8xf32>
    %52 = vector.multi_reduction <add>, %51, %cst_24 [1] : vector<8x8xf32> to vector<8xf32>
    %53 = vector.shape_cast %52 : vector<8xf32> to vector<8x1xf32>
    %54 = vector.broadcast %53 : vector<8x1xf32> to vector<8x8xf32>
    %55 = arith.divf %51, %54 : vector<8x8xf32>
    %56 = vector.shape_cast %55 : vector<8x8xf32> to vector<8x8x1xf32>
    %57 = vector.broadcast %56 : vector<8x8x1xf32> to vector<8x8x128xf32>
    %58 = arith.mulf %0, %57 : vector<8x8x128xf32>
    %cst_25 = arith.constant dense<0.000000e+00> : vector<8x128xf32>
    %59 = vector.multi_reduction <add>, %58, %cst_25 [1] : vector<8x8x128xf32> to vector<8x128xf32>
    %c0_26 = arith.constant 0 : index
    %c0_27 = arith.constant 0 : index
    %60 = vector.load %arg8[%c0_26, %c0_27] : memref<8x128xf32, #tpu.memory_space<vmem>>, vector<8x128xf32>
    tpu.vector_store %arg8[%c0_26, %c0_27], %59 {strides = array<i32>} : memref<8x128xf32, #tpu.memory_space<vmem>>, vector<8x128xf32>,
    return
  }
  func.func @transform_0(%arg0: i32) -> (i32, i32, i32) {
    %c0_i32 = arith.constant 0 : i32
    %c0_i32_0 = arith.constant 0 : i32
    %c0_i32_1 = arith.constant 0 : i32
    return %arg0, %c0_i32, %c0_i32_0 : i32, i32, i32
  }
  func.func @transform_1(%arg0: i32) -> (i32, i32) {
    %c0_i32 = arith.constant 0 : i32
    %c0_i32_0 = arith.constant 0 : i32
    %c0_i32_1 = arith.constant 0 : i32
    return %c0_i32, %c0_i32_0 : i32, i32
  }
  func.func @transform_2(%arg0: i32) -> (i32, i32) {
    %c0_i32 = arith.constant 0 : i32
    %c0_i32_0 = arith.constant 0 : i32
    %c0_i32_1 = arith.constant 0 : i32
    return %c0_i32, %c0_i32_0 : i32, i32
  }
  func.func @transform_3(%arg0: i32) -> (i32, i32) {
    %c0_i32 = arith.constant 0 : i32
    %c0_i32_0 = arith.constant 0 : i32
    %c0_i32_1 = arith.constant 0 : i32
    return %c0_i32, %c0_i32_0 : i32, i32
  }
  func.func @transform_4(%arg0: i32) -> (i32, i32) {
    %c0_i32 = arith.constant 0 : i32
    %c0_i32_0 = arith.constant 0 : i32
    %c0_i32_1 = arith.constant 0 : i32
    return %c0_i32, %c0_i32_0 : i32, i32
  }
  func.func @transform_5(%arg0: i32) -> (i32, i32) {
    %c0_i32 = arith.constant 0 : i32
    %c0_i32_0 = arith.constant 0 : i32
    %c0_i32_1 = arith.constant 0 : i32
    return %c0_i32, %c0_i32_0 : i32, i32
  }
  func.func @transform_6(%arg0: i32) -> (i32, i32) {
    %c0_i32 = arith.constant 0 : i32
    %c0_i32_0 = arith.constant 0 : i32
    %c0_i32_1 = arith.constant 0 : i32
    return %c0_i32, %c0_i32_0 : i32, i32
  }
  func.func @transform_7(%arg0: i32) -> (i32, i32) {
    %c0_i32 = arith.constant 0 : i32
    %c0_i32_0 = arith.constant 0 : i32
    return %arg0, %c0_i32 : i32, i32
  }
}

</mosaic_0001>

<llo_original>
// kernel: attention_pooling.1
$region0: #{attention_pooling.1}
  #allocation0 [shape = 'u32[]', space=smem, size = 0x4, offset = 0x4, fixed_abs, tag = 'smem constant byte address 0x4 - core index']
  #allocation1 [shape = 'u32[144,128]{1,0:T(1,128)}', space=vmem, size = 0x12000, scoped, tag = 'internal scratch']
  #allocation2 [shape = 'f32[1,1]{1,0:T(1,128)S(1)}', space=vmem, size = 0x200, scoped, tag = 'scoped memory for attention_pooling.1']
  %s0 = inlined_call_operand.hbm [shape: f32[16,8,128], index: 0, kind: input, shape index: {}]
  %s1 = inlined_call_operand.hbm [shape: f32[128,128], index: 1, kind: input, shape index: {}]
  %s2 = inlined_call_operand.vmem [shape: f32[1,128], index: 2, kind: input, shape index: {}]
  %s3 = inlined_call_operand.vmem [shape: f32[1,128], index: 3, kind: input, shape index: {}]
  %s4 = inlined_call_operand.vmem [shape: f32[1,128], index: 4, kind: input, shape index: {}]
  %s5 = inlined_call_operand.vmem [shape: f32[1,128], index: 5, kind: input, shape index: {}]
  %s6 = inlined_call_operand.<no memory space> [shape: f32[1,1], index: 6, kind: input, shape index: {}]
  %s7 = inlined_call_operand.hbm [shape: f32[16,128], index: 7, kind: output, shape index: {}]
  %s8 = sld [smem:[#allocation0]]
  $region69: #{attention_pooling.1} parent=0
    _
  %s10 = ssub.s32 1, %s8
  %s11 = scalar_select 0, %s10, %s8
  %v12 = vstv %s6
  %13 = vst [vmem:[#allocation2] sm:$0x1] %v12
  $region1: #{attention_pooling.1} parent=0
    #allocation3 [shape = 'u8[65536]{0}', space=vmem, size = 0x10000, scoped, tag = 'input window, operand 0']
    #allocation4 [shape = 's32[2]{0}', space=sflag, size = 0x8, scoped, tag = 'scoped memory for attention_pooling.1']
    #allocation5 [shape = 's32[2]{0}', space=sflag, size = 0x8, scoped, tag = 'scoped memory for attention_pooling.1']
    #allocation6 [shape = 'u8[65536]{0}', space=vmem, size = 0x10000, scoped, tag = 'input window, operand 1, single buffered']
    #allocation7 [shape = 's32[1]{0}', space=sflag, size = 0x4, scoped, tag = 'scoped memory for attention_pooling.1']
    #allocation8 [shape = 'u8[8192]{0}', space=vmem, size = 0x2000, scoped, tag = 'output window, operand 0']
    %14 = vsyncpa [#allocation4], 0
    %s15 = scalar_lea.sflag [#allocation4], 1
    %16 = vsyncpa %s15, 0
    %17 = vsyncpa [#allocation7], 0
    %18 = vsyncpa [#allocation5], 0
    %s19 = scalar_lea.sflag [#allocation5], 1
    %20 = vsyncpa %s19, 0
    loop: start=0, step=1, limit=4
    $region2: #{attention_pooling.1} parent=1 // loop_pre_header
      _
    $region3: #{attention_pooling.1} parent=1 // loop_header
      %s22 = sphi 0, %s26
      %p23 = scmp.ge.s32.totalorder %s22, 4
      %s32 = sphi 0, %s34
      %s35 = sphi 0, %s32
      %s36 = sphi 0, %s35
      %s52 = sphi 0, %s36
      %s56 = sphi 0, %s56
      %s58 = sphi 0, %s56
      %s59 = sphi 0, %s58
      %s73 = sphi 0, %s59
      %s77 = sphi 0, %s77
      %s79 = sphi 0, %s77
      %s80 = sphi 0, %s79
      %s94 = sphi 0, %s80
      %s98 = sphi 0, %s98
      %s100 = sphi 0, %s98
      %s101 = sphi 0, %s100
      %s115 = sphi 0, %s101
      %s119 = sphi 0, %s119
      %s121 = sphi 0, %s119
      %s122 = sphi 0, %s121
      %s136 = sphi 0, %s122
      %s140 = sphi 0, %s140
      %s142 = sphi 0, %s140
      %s143 = sphi 0, %s142
      %s157 = sphi 0, %s143
      %s161 = sphi 0, %s161
      %s163 = sphi 0, %s161
      %s164 = sphi 0, %s163
      %s178 = sphi 0, %s164
      %s184 = sphi 0, %s186
      %s187 = sphi 0, %s184
      %s188 = sphi 0, %s187
      %s204 = sphi 0, %s188
    $region4: #{attention_pooling.1} parent=1 // loop_header_branch
      %25 = sbr.rel (%p23) target = $region8
    $region5: #{attention_pooling.1} parent=1 // loop_body
      %s27 = ssub.s32 %s22, 1
      %s28 = ssub.s32 %s22, 2
      %s29 = sadd.s32 %s22, 1
      %s30 = ssub.s32 %s22, %s29
      %p31 = scmp.eq.s32.totalorder %s30, 0
      %s33 = sadd.s32 %s32, 1
      %s34 = scalar_select %p31, %s32, %s33
      %p37 = pneg %p31
      %p38 = scmp.eq.s32.totalorder %s22, 1
      %p39 = por %p37, %p38
      %p40 = scmp.ne.s32.totalorder %s32, %s35
      %p41 = scmp.eq.s32.totalorder %s22, 0
      %p42 = por %p40, %p41
      %p43 = scmp.ne.s32.totalorder %s32, %s35
      %p44 = scmp.eq.s32.totalorder %s27, 1
      %p45 = por %p43, %p44
      %p46 = scmp.ne.s32.totalorder %s35, %s36
      %p47 = scmp.eq.s32.totalorder %s27, 0
      %p48 = por %p46, %p47
      %p49 = scmp.ne.s32.totalorder %s35, %s36
      %p50 = scmp.eq.s32.totalorder %s28, 1
      %p51 = por %p49, %p50
      %p53 = scmp.ne.s32.totalorder %s36, %s52
      %p54 = scmp.eq.s32.totalorder %s28, 0
      %p55 = por %p53, %p54
      %s57 = sadd.s32 %s56, 1
      %p60 = scmp.eq.s32.totalorder %s22, 1
      %p61 = scmp.ne.s32.totalorder %s56, %s58
      %p62 = scmp.eq.s32.totalorder %s22, 0
      %p63 = por %p61, %p62
      %p64 = scmp.ne.s32.totalorder %s56, %s58
      %p65 = scmp.eq.s32.totalorder %s27, 1
      %p66 = por %p64, %p65
      %p67 = scmp.ne.s32.totalorder %s58, %s59
      %p68 = scmp.eq.s32.totalorder %s27, 0
      %p69 = por %p67, %p68
      %p70 = scmp.ne.s32.totalorder %s58, %s59
      %p71 = scmp.eq.s32.totalorder %s28, 1
      %p72 = por %p70, %p71
      %p74 = scmp.ne.s32.totalorder %s59, %s73
      %p75 = scmp.eq.s32.totalorder %s28, 0
      %p76 = por %p74, %p75
      %s78 = sadd.s32 %s77, 1
      %p81 = scmp.eq.s32.totalorder %s22, 1
      %p82 = scmp.ne.s32.totalorder %s77, %s79
      %p83 = scmp.eq.s32.totalorder %s22, 0
      %p84 = por %p82, %p83
      %p85 = scmp.ne.s32.totalorder %s77, %s79
      %p86 = scmp.eq.s32.totalorder %s27, 1
      %p87 = por %p85, %p86
      %p88 = scmp.ne.s32.totalorder %s79, %s80
      %p89 = scmp.eq.s32.totalorder %s27, 0
      %p90 = por %p88, %p89
      %p91 = scmp.ne.s32.totalorder %s79, %s80
      %p92 = scmp.eq.s32.totalorder %s28, 1
      %p93 = por %p91, %p92
      %p95 = scmp.ne.s32.totalorder %s80, %s94
      %p96 = scmp.eq.s32.totalorder %s28, 0
      %p97 = por %p95, %p96
      %s99 = sadd.s32 %s98, 1
      %p102 = scmp.eq.s32.totalorder %s22, 1
      %p103 = scmp.ne.s32.totalorder %s98, %s100
      %p104 = scmp.eq.s32.totalorder %s22, 0
      %p105 = por %p103, %p104
      %p106 = scmp.ne.s32.totalorder %s98, %s100
      %p107 = scmp.eq.s32.totalorder %s27, 1
      %p108 = por %p106, %p107
      %p109 = scmp.ne.s32.totalorder %s100, %s101
      %p110 = scmp.eq.s32.totalorder %s27, 0
      %p111 = por %p109, %p110
      %p112 = scmp.ne.s32.totalorder %s100, %s101
      %p113 = scmp.eq.s32.totalorder %s28, 1
      %p114 = por %p112, %p113
      %p116 = scmp.ne.s32.totalorder %s101, %s115
      %p117 = scmp.eq.s32.totalorder %s28, 0
      %p118 = por %p116, %p117
      %s120 = sadd.s32 %s119, 1
      %p123 = scmp.eq.s32.totalorder %s22, 1
      %p124 = scmp.ne.s32.totalorder %s119, %s121
      %p125 = scmp.eq.s32.totalorder %s22, 0
      %p126 = por %p124, %p125
      %p127 = scmp.ne.s32.totalorder %s119, %s121
      %p128 = scmp.eq.s32.totalorder %s27, 1
      %p129 = por %p127, %p128
      %p130 = scmp.ne.s32.totalorder %s121, %s122
      %p131 = scmp.eq.s32.totalorder %s27, 0
      %p132 = por %p130, %p131
      %p133 = scmp.ne.s32.totalorder %s121, %s122
      %p134 = scmp.eq.s32.totalorder %s28, 1
      %p135 = por %p133, %p134
      %p137 = scmp.ne.s32.totalorder %s122, %s136
      %p138 = scmp.eq.s32.totalorder %s28, 0
      %p139 = por %p137, %p138
      %s141 = sadd.s32 %s140, 1
      %p144 = scmp.eq.s32.totalorder %s22, 1
      %p145 = scmp.ne.s32.totalorder %s140, %s142
      %p146 = scmp.eq.s32.totalorder %s22, 0
      %p147 = por %p145, %p146
      %p148 = scmp.ne.s32.totalorder %s140, %s142
      %p149 = scmp.eq.s32.totalorder %s27, 1
      %p150 = por %p148, %p149
      %p151 = scmp.ne.s32.totalorder %s142, %s143
      %p152 = scmp.eq.s32.totalorder %s27, 0
      %p153 = por %p151, %p152
      %p154 = scmp.ne.s32.totalorder %s142, %s143
      %p155 = scmp.eq.s32.totalorder %s28, 1
      %p156 = por %p154, %p155
      %p158 = scmp.ne.s32.totalorder %s143, %s157
      %p159 = scmp.eq.s32.totalorder %s28, 0
      %p160 = por %p158, %p159
      %s162 = sadd.s32 %s161, 1
      %p165 = scmp.eq.s32.totalorder %s22, 1
      %p166 = scmp.ne.s32.totalorder %s161, %s163
      %p167 = scmp.eq.s32.totalorder %s22, 0
      %p168 = por %p166, %p167
      %p169 = scmp.ne.s32.totalorder %s161, %s163
      %p170 = scmp.eq.s32.totalorder %s27, 1
      %p171 = por %p169, %p170
      %p172 = scmp.ne.s32.totalorder %s163, %s164
      %p173 = scmp.eq.s32.totalorder %s27, 0
      %p174 = por %p172, %p173
      %p175 = scmp.ne.s32.totalorder %s163, %s164
      %p176 = scmp.eq.s32.totalorder %s28, 1
      %p177 = por %p175, %p176
      %p179 = scmp.ne.s32.totalorder %s164, %s178
      %p180 = scmp.eq.s32.totalorder %s28, 0
      %p181 = por %p179, %p180
      %s182 = ssub.s32 %s22, %s29
      %p183 = scmp.eq.s32.totalorder %s182, 0
      %s185 = sadd.s32 %s184, 1
      %s186 = scalar_select %p183, %s184, %s185
      %p189 = pneg %p183
      %p190 = scmp.eq.s32.totalorder %s22, 1
      %p191 = por %p189, %p190
      %p192 = scmp.ne.s32.totalorder %s184, %s187
      %p193 = scmp.eq.s32.totalorder %s22, 0
      %p194 = por %p192, %p193
      %p195 = scmp.ne.s32.totalorder %s184, %s187
      %p196 = scmp.eq.s32.totalorder %s27, 1
      %p197 = por %p195, %p196
      %p198 = scmp.ne.s32.totalorder %s187, %s188
      %p199 = scmp.eq.s32.totalorder %s27, 0
      %p200 = por %p198, %p199
      %p201 = scmp.ne.s32.totalorder %s187, %s188
      %p202 = scmp.eq.s32.totalorder %s28, 1
      %p203 = por %p201, %p202
      %p205 = scmp.ne.s32.totalorder %s188, %s204
      %p206 = scmp.eq.s32.totalorder %s28, 0
      %p207 = por %p205, %p206
      %p208 = scmp.le.s32.totalorder 1, %s22
      %p209 = scmp.lt.s32.totalorder %s22, 3
      %p210 = pnand %p208, %p209
      %p211 = pneg %p210
      // Predicated region
      $region9: #{attention_pooling.1} parent=5 // pred_check
        _
      $region10: #{attention_pooling.1} parent=5 // pred_check_branch
        %213 = sbr.rel (%p210) target = $region12
      $region11: #{attention_pooling.1} parent=5 // pred_region
        %s214 = ssub.s32 %s22, 1
        // Predicated region
        $region13: #{attention_pooling.1} parent=11 // pred_check
          %p215 = pneg %p69
        $region14: #{attention_pooling.1} parent=11 // pred_check_branch
          %217 = sbr.rel (%p215) target = $region16
        $region15: #{attention_pooling.1} parent=11 // pred_region
          %s219 = ssub.s32 2048, 2048
          %220 = vsyncadd [#allocation7], %s219
          %s221 = sshll.u32 [#allocation6], 4
          %s222 = int_to_ptr.vmem [resolvable:$true] %s221
          %227 = dma.hbm_to_vmem [thread:$0]  %s1, 2048, %s222, [#allocation7], 128, 128, 8
        $region16: #{attention_pooling.1} parent=11 // pred_fallthru
          _
        // Predicated region
        $region17: #{attention_pooling.1} parent=11 // pred_check
          %p228 = pneg %p90
        $region18: #{attention_pooling.1} parent=11 // pred_check_branch
          %230 = sbr.rel (%p228) target = $region20
        $region19: #{attention_pooling.1} parent=11 // pred_region
          _
        $region20: #{attention_pooling.1} parent=11 // pred_fallthru
          _
        // Predicated region
        $region21: #{attention_pooling.1} parent=11 // pred_check
          %p231 = pneg %p111
        $region22: #{attention_pooling.1} parent=11 // pred_check_branch
          %233 = sbr.rel (%p231) target = $region24
        $region23: #{attention_pooling.1} parent=11 // pred_region
          _
        $region24: #{attention_pooling.1} parent=11 // pred_fallthru
          _
        // Predicated region
        $region25: #{attention_pooling.1} parent=11 // pred_check
          %p234 = pneg %p132
        $region26: #{attention_pooling.1} parent=11 // pred_check_branch
          %236 = sbr.rel (%p234) target = $region28
        $region27: #{attention_pooling.1} parent=11 // pred_region
          _
        $region28: #{attention_pooling.1} parent=11 // pred_fallthru
          _
        // Predicated region
        $region29: #{attention_pooling.1} parent=11 // pred_check
          %p237 = pneg %p153
        $region30: #{attention_pooling.1} parent=11 // pred_check_branch
          %239 = sbr.rel (%p237) target = $region32
        $region31: #{attention_pooling.1} parent=11 // pred_region
          _
        $region32: #{attention_pooling.1} parent=11 // pred_fallthru
          _
        // Predicated region
        $region33: #{attention_pooling.1} parent=11 // pred_check
          %p240 = pneg %p174
        $region34: #{attention_pooling.1} parent=11 // pred_check_branch
          %242 = sbr.rel (%p240) target = $region36
        $region35: #{attention_pooling.1} parent=11 // pred_region
          _
        $region36: #{attention_pooling.1} parent=11 // pred_fallthru
          _
      $region12: #{attention_pooling.1} parent=5 // pred_fallthru
        _
      %p243 = scmp.lt.s32.totalorder %s22, 2
      // Predicated region
      $region37: #{attention_pooling.1} parent=5 // pred_check
        %p244 = pneg %p243
      $region38: #{attention_pooling.1} parent=5 // pred_check_branch
        %246 = sbr.rel (%p244) target = $region40
      $region39: #{attention_pooling.1} parent=5 // pred_region
        // Predicated region
        $region41: #{attention_pooling.1} parent=39 // pred_check
          %p247 = pneg %p42
        $region42: #{attention_pooling.1} parent=39 // pred_check_branch
          %249 = sbr.rel (%p247) target = $region44
        $region43: #{attention_pooling.1} parent=39 // pred_region
          %s250 = sand.u32 %s32, 1
          %s251 = scalar_lea.sflag [#allocation4], %s250
          %s252 = sand.u32 %s32, 1
          %s253 = smul.addr %s252, 64
          %s254 = scalar_lea.vmem [#allocation3], %s253
          %s255 = smul.u32 8, %s22
          %s257 = ssub.s32 1024, 1024
          %258 = vsyncadd %s251, %s257
          %s259 = smul.addr %s255, 128
          %s260 = scalar_lea.hbm %s0, %s259
          %s261 = sshll.u32 %s254, 4
          %s262 = int_to_ptr.vmem [resolvable:$true] %s261
          %267 = dma.hbm_to_vmem [thread:$0]  %s260, 1024, %s262, %s251, 128, 128, 8
        $region44: #{attention_pooling.1} parent=39 // pred_fallthru
          _
      $region40: #{attention_pooling.1} parent=5 // pred_fallthru
        _
      %p268 = scmp.le.s32.totalorder 1, %s22
      %p269 = scmp.lt.s32.totalorder %s22, 3
      %p270 = pnand %p268, %p269
      %p271 = pneg %p270
      // Predicated region
      $region45: #{attention_pooling.1} parent=5 // pred_check
        _
      $region46: #{attention_pooling.1} parent=5 // pred_check_branch
        %273 = sbr.rel (%p270) target = $region48
      $region47: #{attention_pooling.1} parent=5 // pred_region
        %s274 = ssub.s32 %s22, 1
        %s275 = sand.u32 %s35, 1
        %s276 = scalar_lea.sflag [#allocation4], %s275
        %s277 = sand.u32 %s35, 1
        %s278 = smul.addr %s277, 64
        %s279 = scalar_lea.vmem [#allocation3], %s278
        // Predicated region
        $region49: #{attention_pooling.1} parent=47 // pred_check
          %p280 = pneg %p48
        $region50: #{attention_pooling.1} parent=47 // pred_check_branch
          %282 = sbr.rel (%p280) target = $region52
        $region51: #{attention_pooling.1} parent=47 // pred_region
          %283 = dma.done %s276, 1024
        $region52: #{attention_pooling.1} parent=47 // pred_fallthru
          _
        // Predicated region
        $region53: #{attention_pooling.1} parent=47 // pred_check
          %p284 = pneg %p69
        $region54: #{attention_pooling.1} parent=47 // pred_check_branch
          %286 = sbr.rel (%p284) target = $region56
        $region55: #{attention_pooling.1} parent=47 // pred_region
          %287 = dma.done [#allocation7], 2048
        $region56: #{attention_pooling.1} parent=47 // pred_fallthru
          _
        %s288 = sand.u32 %s35, 1
        %s289 = scalar_lea.sflag [#allocation4], %s288
        %s290 = sand.u32 %s35, 1
        %s291 = smul.addr %s290, 64
        %s292 = scalar_lea.vmem [#allocation3], %s291
        %p293 = pneg %p48
        %p294 = pneg %p45
        %p295 = pneg %p69
        %p296 = pneg %p66
        %p297 = pneg %p90
        %p298 = pneg %p87
        %p299 = pneg %p111
        %p300 = pneg %p108
        %p301 = pneg %p132
        %p302 = pneg %p129
        %p303 = pneg %p153
        %p304 = pneg %p150
        %p305 = pneg %p174
        %p306 = pneg %p171
        %p307 = pneg %p200
        %p308 = pneg %p197
        %s309 = sand.u32 %s187, 1
        %s310 = scalar_lea.sflag [#allocation5], %s309
        %s311 = sand.u32 %s187, 1
        %s312 = smul.addr %s311, 8
        %s313 = scalar_lea.vmem [#allocation8], %s312
        %s314 = smul.u32 8, %s27
        %v315 = vld [vmem:[%s279] sm:$0xff]
        %v316 = vld [vmem:[%s279 + $0x8] sm:$0xff]
        %v317 = vld [vmem:[%s279 + $0x10] sm:$0xff]
        %v318 = vld [vmem:[%s279 + $0x18] sm:$0xff]
        %v319 = vld [vmem:[%s279 + $0x20] sm:$0xff]
        %v320 = vld [vmem:[%s279 + $0x28] sm:$0xff]
        %v321 = vld [vmem:[%s279 + $0x30] sm:$0xff]
        %v322 = vld [vmem:[%s279 + $0x38] sm:$0xff]
        %v323 = vld [vmem:[#allocation6] sm:$0xff]
        %v324 = vld [vmem:[#allocation6 + $0x8] sm:$0xff]
        %v325 = vld [vmem:[#allocation6 + $0x10] sm:$0xff]
        %v326 = vld [vmem:[#allocation6 + $0x18] sm:$0xff]
        %v327 = vld [vmem:[#allocation6 + $0x20] sm:$0xff]
        %v328 = vld [vmem:[#allocation6 + $0x28] sm:$0xff]
        %v329 = vld [vmem:[#allocation6 + $0x30] sm:$0xff]
        %v330 = vld [vmem:[#allocation6 + $0x38] sm:$0xff]
        %v331 = vld [vmem:[#allocation6 + $0x40] sm:$0xff]
        %v332 = vld [vmem:[#allocation6 + $0x48] sm:$0xff]
        %v333 = vld [vmem:[#allocation6 + $0x50] sm:$0xff]
        %v334 = vld [vmem:[#allocation6 + $0x58] sm:$0xff]
        %v335 = vld [vmem:[#allocation6 + $0x60] sm:$0xff]
        %v336 = vld [vmem:[#allocation6 + $0x68] sm:$0xff]
        %v337 = vld [vmem:[#allocation6 + $0x70] sm:$0xff]
        %v338 = vld [vmem:[#allocation6 + $0x78] sm:$0xff]
        %v339 = vld [vmem:[%s2] sm:$0x1]
        %v341 = vlaneseq
        %v342 = vshrl.u32 %v341, 7
        %v343 = vsub.s32 0, %v342
        %v344 = vrot.slane %v339, %v343
        %346 = vmatprep.subr.mxu0 0.0
        %347 = vmatpush1.msra.mxu0 %v338
        %348 = vmatprep.subr.mxu0 0.0
        %349 = vmatpush1.msra.mxu0 %v337
        %350 = vmatprep.subr.mxu0 0.0
        %351 = vmatpush1.msra.mxu0 %v336
        %352 = vmatprep.subr.mxu0 0.0
        %353 = vmatpush1.msra.mxu0 %v335
        %354 = vmatprep.subr.mxu0 0.0
        %355 = vmatpush1.msra.mxu0 %v334
        %356 = vmatprep.subr.mxu0 0.0
        %357 = vmatpush1.msra.mxu0 %v333
        %358 = vmatprep.subr.mxu0 0.0
        %359 = vmatpush1.msra.mxu0 %v332
        %360 = vmatprep.subr.mxu0 0.0
        %361 = vmatpush1.msra.mxu0 %v331
        %362 = vmatprep.subr.mxu0 0.0
        %363 = vmatpush1.msra.mxu0 %v330
        %364 = vmatprep.subr.mxu0 0.0
        %365 = vmatpush1.msra.mxu0 %v329
        %366 = vmatprep.subr.mxu0 0.0
        %367 = vmatpush1.msra.mxu0 %v328
        %368 = vmatprep.subr.mxu0 0.0
        %369 = vmatpush1.msra.mxu0 %v327
        %370 = vmatprep.subr.mxu0 0.0
        %371 = vmatpush1.msra.mxu0 %v326
        %372 = vmatprep.subr.mxu0 0.0
        %373 = vmatpush1.msra.mxu0 %v325
        %374 = vmatprep.subr.mxu0 0.0
        %375 = vmatpush1.msra.mxu0 %v324
        %376 = vmatprep.subr.mxu0 0.0
        %377 = vmatpush1.msra.mxu0 %v323
        %378 = vmatprep.subr.mxu0 0.0
        %379 = vmatpush2.msra.mxu0 0.0
        %380 = vmatprep.subr.mxu0 0.0
        %381 = vmatpush2.msra.mxu0 0.0
        %382 = vmatprep.subr.mxu0 0.0
        %383 = vmatpush2.msra.mxu0 0.0
        %384 = vmatprep.subr.mxu0 0.0
        %385 = vmatpush2.msra.mxu0 0.0
        %386 = vmatprep.subr.mxu0 0.0
        %387 = vmatpush2.msra.mxu0 0.0
        %388 = vmatprep.subr.mxu0 0.0
        %389 = vmatpush2.msra.mxu0 0.0
        %390 = vmatprep.subr.mxu0 0.0
        %391 = vmatpush2.msra.mxu0 0.0
        %392 = vmatprep.subr.mxu0 0.0
        %393 = vmatpush2.msra.mxu0 0.0
        %394 = vmatprep.subr.mxu0 0.0
        %395 = vmatpush2.msra.mxu0 0.0
        %396 = vmatprep.subr.mxu0 0.0
        %397 = vmatpush2.msra.mxu0 0.0
        %398 = vmatprep.subr.mxu0 0.0
        %399 = vmatpush2.msra.mxu0 0.0
        %400 = vmatprep.subr.mxu0 0.0
        %401 = vmatpush2.msra.mxu0 0.0
        %402 = vmatprep.subr.mxu0 0.0
        %403 = vmatpush2.msra.mxu0 0.0
        %404 = vmatprep.subr.mxu0 0.0
        %405 = vmatpush2.msra.mxu0 0.0
        %406 = vmatprep.subr.mxu0 0.0
        %407 = vmatpush2.msra.mxu0 0.0
        %408 = vmatprep.subr.mxu0 0.0
        %409 = vmatpush2.msra.mxu0 0.0
        %410 = vmatprep.mubr.f32.mxu0 0.0
        %411 = vmatmul.mubr.f32.gmra.mxu0 %v315
        %v412 = vpop.f32.mrf.mxu0
        %v413 = vadd.f32 %v344, %v412
        %v414 = vpop.f32.mrf.mxu0
        %415 = vmatprep.mubr.f32.mxu0 0.0
        %416 = vmatmul.mubr.f32.gmra.mxu0 %v316
        %v417 = vpop.f32.mrf.mxu0
        %v418 = vadd.f32 %v344, %v417
        %v419 = vpop.f32.mrf.mxu0
        %420 = vmatprep.mubr.f32.mxu0 0.0
        %421 = vmatmul.mubr.f32.gmra.mxu0 %v317
        %v422 = vpop.f32.mrf.mxu0
        %v423 = vadd.f32 %v344, %v422
        %v424 = vpop.f32.mrf.mxu0
        %425 = vmatprep.mubr.f32.mxu0 0.0
        %426 = vmatmul.mubr.f32.gmra.mxu0 %v318
        %v427 = vpop.f32.mrf.mxu0
        %v428 = vadd.f32 %v344, %v427
        %v429 = vpop.f32.mrf.mxu0
        %430 = vmatprep.mubr.f32.mxu0 0.0
        %431 = vmatmul.mubr.f32.gmra.mxu0 %v319
        %v432 = vpop.f32.mrf.mxu0
        %v433 = vadd.f32 %v344, %v432
        %v434 = vpop.f32.mrf.mxu0
        %435 = vmatprep.mubr.f32.mxu0 0.0
        %436 = vmatmul.mubr.f32.gmra.mxu0 %v320
        %v437 = vpop.f32.mrf.mxu0
        %v438 = vadd.f32 %v344, %v437
        %v439 = vpop.f32.mrf.mxu0
        %440 = vmatprep.mubr.f32.mxu0 0.0
        %441 = vmatmul.mubr.f32.gmra.mxu0 %v321
        %v442 = vpop.f32.mrf.mxu0
        %v443 = vadd.f32 %v344, %v442
        %v444 = vpop.f32.mrf.mxu0
        %445 = vmatprep.mubr.f32.mxu0 0.0
        %446 = vmatmul.mubr.f32.gmra.mxu0 %v322
        %v447 = vpop.f32.mrf.mxu0
        %v448 = vadd.f32 %v344, %v447
        %v449 = vpop.f32.mrf.mxu0
        %450 = vdwg.mxu0
        %451 = vadd.xlane.f32.xlu0 %v413
        %v452 = vpop.xlane.xlu0 %451
        %453 = vadd.xlane.f32.xlu0 %v418
        %v454 = vpop.xlane.xlu0 %453
        %455 = vadd.xlane.f32.xlu0 %v423
        %v456 = vpop.xlane.xlu0 %455
        %457 = vadd.xlane.f32.xlu0 %v428
        %v458 = vpop.xlane.xlu0 %457
        %459 = vadd.xlane.f32.xlu0 %v433
        %v460 = vpop.xlane.xlu0 %459
        %461 = vadd.xlane.f32.xlu0 %v438
        %v462 = vpop.xlane.xlu0 %461
        %463 = vadd.xlane.f32.xlu0 %v443
        %v464 = vpop.xlane.xlu0 %463
        %465 = vadd.xlane.f32.xlu0 %v448
        %v466 = vpop.xlane.xlu0 %465
        %v467 = vrcp.pop 128.0
        %v468 = vmul.f32 %v452, %v467
        %v469 = vmul.f32 %v454, %v467
        %v470 = vmul.f32 %v456, %v467
        %v471 = vmul.f32 %v458, %v467
        %v472 = vmul.f32 %v460, %v467
        %v473 = vmul.f32 %v462, %v467
        %v474 = vmul.f32 %v464, %v467
        %v475 = vmul.f32 %v466, %v467
        %v476 = vsub.f32 %v413, %v468
        %v477 = vsub.f32 %v418, %v469
        %v478 = vsub.f32 %v423, %v470
        %v479 = vsub.f32 %v428, %v471
        %v480 = vsub.f32 %v433, %v472
        %v481 = vsub.f32 %v438, %v473
        %v482 = vsub.f32 %v443, %v474
        %v483 = vsub.f32 %v448, %v475
        %v484 = vmul.f32 %v476, %v476
        %v485 = vmul.f32 %v477, %v477
        %v486 = vmul.f32 %v478, %v478
        %v487 = vmul.f32 %v479, %v479
        %v488 = vmul.f32 %v480, %v480
        %v489 = vmul.f32 %v481, %v481
        %v490 = vmul.f32 %v482, %v482
        %v491 = vmul.f32 %v483, %v483
        %492 = vadd.xlane.f32.xlu0 %v484
        %v493 = vpop.xlane.xlu0 %492
        %494 = vadd.xlane.f32.xlu0 %v485
        %v495 = vpop.xlane.xlu0 %494
        %496 = vadd.xlane.f32.xlu0 %v486
        %v497 = vpop.xlane.xlu0 %496
        %498 = vadd.xlane.f32.xlu0 %v487
        %v499 = vpop.xlane.xlu0 %498
        %500 = vadd.xlane.f32.xlu0 %v488
        %v501 = vpop.xlane.xlu0 %500
        %502 = vadd.xlane.f32.xlu0 %v489
        %v503 = vpop.xlane.xlu0 %502
        %504 = vadd.xlane.f32.xlu0 %v490
        %v505 = vpop.xlane.xlu0 %504
        %506 = vadd.xlane.f32.xlu0 %v491
        %v507 = vpop.xlane.xlu0 %506
        %v508 = vmul.f32 %v493, %v467
        %v509 = vmul.f32 %v495, %v467
        %v510 = vmul.f32 %v497, %v467
        %v511 = vmul.f32 %v499, %v467
        %v512 = vmul.f32 %v501, %v467
        %v513 = vmul.f32 %v503, %v467
        %v514 = vmul.f32 %v505, %v467
        %v515 = vmul.f32 %v507, %v467
        %v516 = vadd.f32 %v508, 1e-05
        %v517 = vadd.f32 %v509, 1e-05
        %v518 = vadd.f32 %v510, 1e-05
        %v519 = vadd.f32 %v511, 1e-05
        %v520 = vadd.f32 %v512, 1e-05
        %v521 = vadd.f32 %v513, 1e-05
        %v522 = vadd.f32 %v514, 1e-05
        %v523 = vadd.f32 %v515, 1e-05
        %v524 = vrsqrt.pop %v516
        %v525 = vrsqrt.pop %v517
        %v526 = vrsqrt.pop %v518
        %v527 = vrsqrt.pop %v519
        %v528 = vrsqrt.pop %v520
        %v529 = vrsqrt.pop %v521
        %v530 = vrsqrt.pop %v522
        %v531 = vrsqrt.pop %v523
        %v532 = vmul.f32 %v476, %v524
        %v533 = vmul.f32 %v477, %v525
        %v534 = vmul.f32 %v478, %v526
        %v535 = vmul.f32 %v479, %v527
        %v536 = vmul.f32 %v480, %v528
        %v537 = vmul.f32 %v481, %v529
        %v538 = vmul.f32 %v482, %v530
        %v539 = vmul.f32 %v483, %v531
        %v540 = vld [vmem:[%s3] sm:$0x1]
        %v542 = vlaneseq
        %v543 = vshrl.u32 %v542, 7
        %v544 = vsub.s32 0, %v543
        %v545 = vrot.slane %v540, %v544
        %v547 = vmul.f32 %v532, %v545
        %v548 = vmul.f32 %v533, %v545
        %v549 = vmul.f32 %v534, %v545
        %v550 = vmul.f32 %v535, %v545
        %v551 = vmul.f32 %v536, %v545
        %v552 = vmul.f32 %v537, %v545
        %v553 = vmul.f32 %v538, %v545
        %v554 = vmul.f32 %v539, %v545
        %v555 = vld [vmem:[%s4] sm:$0x1]
        %v557 = vlaneseq
        %v558 = vshrl.u32 %v557, 7
        %v559 = vsub.s32 0, %v558
        %v560 = vrot.slane %v555, %v559
        %v562 = vadd.f32 %v547, %v560
        %v563 = vadd.f32 %v548, %v560
        %v564 = vadd.f32 %v549, %v560
        %v565 = vadd.f32 %v550, %v560
        %v566 = vadd.f32 %v551, %v560
        %v567 = vadd.f32 %v552, %v560
        %v568 = vadd.f32 %v553, %v560
        %v569 = vadd.f32 %v554, %v560
        %v570 = vmul.f32 %v562, 0.5
        %v571 = vmul.f32 %v563, 0.5
        %v572 = vmul.f32 %v564, 0.5
        %v573 = vmul.f32 %v565, 0.5
        %v574 = vmul.f32 %v566, 0.5
        %v575 = vmul.f32 %v567, 0.5
        %v576 = vmul.f32 %v568, 0.5
        %v577 = vmul.f32 %v569, 0.5
        %v578 = vmul.f32 %v562, 0.70710677
        %v579 = vmul.f32 %v563, 0.70710677
        %v580 = vmul.f32 %v564, 0.70710677
        %v581 = vmul.f32 %v565, 0.70710677
        %v582 = vmul.f32 %v566, 0.70710677
        %v583 = vmul.f32 %v567, 0.70710677
        %v584 = vmul.f32 %v568, 0.70710677
        %v585 = vmul.f32 %v569, 0.70710677
        %v586 = verf.f32.pop %v578
        %v587 = verf.f32.pop %v579
        %v588 = verf.f32.pop %v580
        %v589 = verf.f32.pop %v581
        %v590 = verf.f32.pop %v582
        %v591 = verf.f32.pop %v583
        %v592 = verf.f32.pop %v584
        %v593 = verf.f32.pop %v585
        %v594 = vadd.f32 %v586, 1.0
        %v595 = vadd.f32 %v587, 1.0
        %v596 = vadd.f32 %v588, 1.0
        %v597 = vadd.f32 %v589, 1.0
        %v598 = vadd.f32 %v590, 1.0
        %v599 = vadd.f32 %v591, 1.0
        %v600 = vadd.f32 %v592, 1.0
        %v601 = vadd.f32 %v593, 1.0
        %v602 = vmul.f32 %v570, %v594
        %v603 = vmul.f32 %v571, %v595
        %v604 = vmul.f32 %v572, %v596
        %v605 = vmul.f32 %v573, %v597
        %v606 = vmul.f32 %v574, %v598
        %v607 = vmul.f32 %v575, %v599
        %v608 = vmul.f32 %v576, %v600
        %v609 = vmul.f32 %v577, %v601
        %v610 = vld [vmem:[%s5] sm:$0x1]
        %v612 = vlaneseq
        %v613 = vshrl.u32 %v612, 7
        %v614 = vsub.s32 0, %v613
        %v615 = vrot.slane %v610, %v614
        %v617 = vmul.f32 %v602, %v615
        %v618 = vmul.f32 %v603, %v615
        %v619 = vmul.f32 %v604, %v615
        %v620 = vmul.f32 %v605, %v615
        %v621 = vmul.f32 %v606, %v615
        %v622 = vmul.f32 %v607, %v615
        %v623 = vmul.f32 %v608, %v615
        %v624 = vmul.f32 %v609, %v615
        %625 = vadd.xlane.f32.xlu0 %v617
        %v626 = vpop.xlane.xlu0 %625
        %627 = vadd.xlane.f32.xlu0 %v618
        %v628 = vpop.xlane.xlu0 %627
        %629 = vadd.xlane.f32.xlu0 %v619
        %v630 = vpop.xlane.xlu0 %629
        %631 = vadd.xlane.f32.xlu0 %v620
        %v632 = vpop.xlane.xlu0 %631
        %633 = vadd.xlane.f32.xlu0 %v621
        %v634 = vpop.xlane.xlu0 %633
        %635 = vadd.xlane.f32.xlu0 %v622
        %v636 = vpop.xlane.xlu0 %635
        %637 = vadd.xlane.f32.xlu0 %v623
        %v638 = vpop.xlane.xlu0 %637
        %639 = vadd.xlane.f32.xlu0 %v624
        %v640 = vpop.xlane.xlu0 %639
        %v641 = vld [vmem:[#allocation2] sm:$0x1]
        %v643 = vlaneseq
        %v644 = vshrl.u32 %v643, 7
        %v645 = vsub.s32 0, %v644
        %v646 = vrot.slane %v641, %v645
        %647 = vset.pattern.permute.xlu0 0
        %648 = vperm.xlu0 %647, %v646
        %v649 = vpop.permute.xlu0 %648
        %v651 = vadd.f32 %v626, %v649
        %v652 = vadd.f32 %v628, %v649
        %v653 = vadd.f32 %v630, %v649
        %v654 = vadd.f32 %v632, %v649
        %v655 = vadd.f32 %v634, %v649
        %v656 = vadd.f32 %v636, %v649
        %v657 = vadd.f32 %v638, %v649
        %v658 = vadd.f32 %v640, %v649
        %v667 = vlaneseq
        %v668 = vand.u32 %v667, 127
        %v669 = vlaneseq
        %v670 = vshrl.u32 %v669, 7
        %v671 = vsub.s32 %v668, %v670
        %v672 = vrot.slane %v651, %v671
        %v673 = vlaneseq
        %v674 = vshrl.u32 %v673, 7
        %v675 = vsub.s32 %v668, %v674
        %v676 = vrot.slane %v652, %v675
        %v677 = vlaneseq
        %v678 = vshrl.u32 %v677, 7
        %v679 = vsub.s32 %v668, %v678
        %v680 = vrot.slane %v653, %v679
        %v681 = vlaneseq
        %v682 = vshrl.u32 %v681, 7
        %v683 = vsub.s32 %v668, %v682
        %v684 = vrot.slane %v654, %v683
        %v685 = vlaneseq
        %v686 = vshrl.u32 %v685, 7
        %v687 = vsub.s32 %v668, %v686
        %v688 = vrot.slane %v655, %v687
        %v689 = vlaneseq
        %v690 = vshrl.u32 %v689, 7
        %v691 = vsub.s32 %v668, %v690
        %v692 = vrot.slane %v656, %v691
        %v693 = vlaneseq
        %v694 = vshrl.u32 %v693, 7
        %v695 = vsub.s32 %v668, %v694
        %v696 = vrot.slane %v657, %v695
        %v697 = vlaneseq
        %v698 = vshrl.u32 %v697, 7
        %v699 = vsub.s32 %v668, %v698
        %v700 = vrot.slane %v658, %v699
        %vm701 = vcmask 1041409
        %v702 = vsel %vm701, %v676, %v672
        %vm703 = vcmask 1042434
        %v704 = vsel %vm703, %v680, %v702
        %vm705 = vcmask 1043459
        %v706 = vsel %vm705, %v684, %v704
        %vm707 = vcmask 1044484
        %v708 = vsel %vm707, %v688, %v706
        %vm709 = vcmask 1045509
        %v710 = vsel %vm709, %v692, %v708
        %vm711 = vcmask 1046534
        %v712 = vsel %vm711, %v696, %v710
        %vm713 = vcmask 1047559
        %v714 = vsel %vm713, %v700, %v712
        %vm716 = vcmask 64512
        %v717 = vsel %vm716, %v714, -inf
        %718 = vmax.xlane.f32.xlu0 %v717
        %v719 = vpop.xlane.xlu0 %718
        %v721 = vlaneseq
        %v722 = vshrl.u32 %v721, 7
        %v723 = vsub.s32 0, %v722
        %v724 = vrot.slane %v719, %v723
        %v725 = vlaneseq
        %v726 = vshrl.u32 %v725, 7
        %v727 = vsub.s32 1, %v726
        %v728 = vrot.slane %v719, %v727
        %v729 = vlaneseq
        %v730 = vshrl.u32 %v729, 7
        %v731 = vsub.s32 2, %v730
        %v732 = vrot.slane %v719, %v731
        %v733 = vlaneseq
        %v734 = vshrl.u32 %v733, 7
        %v735 = vsub.s32 3, %v734
        %v736 = vrot.slane %v719, %v735
        %v737 = vlaneseq
        %v738 = vshrl.u32 %v737, 7
        %v739 = vsub.s32 4, %v738
        %v740 = vrot.slane %v719, %v739
        %v741 = vlaneseq
        %v742 = vshrl.u32 %v741, 7
        %v743 = vsub.s32 5, %v742
        %v744 = vrot.slane %v719, %v743
        %v745 = vlaneseq
        %v746 = vshrl.u32 %v745, 7
        %v747 = vsub.s32 6, %v746
        %v748 = vrot.slane %v719, %v747
        %v749 = vlaneseq
        %v750 = vshrl.u32 %v749, 7
        %v751 = vsub.s32 7, %v750
        %v752 = vrot.slane %v719, %v751
        %v761 = vsub.f32 %v651, %v724
        %v762 = vsub.f32 %v652, %v728
        %v763 = vsub.f32 %v653, %v732
        %v764 = vsub.f32 %v654, %v736
        %v765 = vsub.f32 %v655, %v740
        %v766 = vsub.f32 %v656, %v744
        %v767 = vsub.f32 %v657, %v748
        %v768 = vsub.f32 %v658, %v752
        %v769 = vmul.f32 %v761, 1.442695
        %v770 = vpow.pop %v769
        %v771 = vmul.f32 %v762, 1.442695
        %v772 = vpow.pop %v771
        %v773 = vmul.f32 %v763, 1.442695
        %v774 = vpow.pop %v773
        %v775 = vmul.f32 %v764, 1.442695
        %v776 = vpow.pop %v775
        %v777 = vmul.f32 %v765, 1.442695
        %v778 = vpow.pop %v777
        %v779 = vmul.f32 %v766, 1.442695
        %v780 = vpow.pop %v779
        %v781 = vmul.f32 %v767, 1.442695
        %v782 = vpow.pop %v781
        %v783 = vmul.f32 %v768, 1.442695
        %v784 = vpow.pop %v783
        %793 = vset.pattern.permute.xlu0 0
        %794 = vperm.xlu0 %793, %v770
        %v795 = vpop.permute.xlu0 %794
        %796 = vset.pattern.permute.xlu0 0
        %797 = vperm.xlu0 %796, %v772
        %v798 = vpop.permute.xlu0 %797
        %799 = vset.pattern.permute.xlu0 0
        %800 = vperm.xlu0 %799, %v774
        %v801 = vpop.permute.xlu0 %800
        %802 = vset.pattern.permute.xlu0 0
        %803 = vperm.xlu0 %802, %v776
        %v804 = vpop.permute.xlu0 %803
        %805 = vset.pattern.permute.xlu0 0
        %806 = vperm.xlu0 %805, %v778
        %v807 = vpop.permute.xlu0 %806
        %808 = vset.pattern.permute.xlu0 0
        %809 = vperm.xlu0 %808, %v780
        %v810 = vpop.permute.xlu0 %809
        %811 = vset.pattern.permute.xlu0 0
        %812 = vperm.xlu0 %811, %v782
        %v813 = vpop.permute.xlu0 %812
        %814 = vset.pattern.permute.xlu0 0
        %815 = vperm.xlu0 %814, %v784
        %v816 = vpop.permute.xlu0 %815
        %v817 = vlaneseq
        %v818 = vshrl.u32 %v817, 7
        %v819 = vsub.s32 %v668, %v818
        %v820 = vrot.slane %v795, %v819
        %v821 = vlaneseq
        %v822 = vshrl.u32 %v821, 7
        %v823 = vsub.s32 %v668, %v822
        %v824 = vrot.slane %v798, %v823
        %v825 = vlaneseq
        %v826 = vshrl.u32 %v825, 7
        %v827 = vsub.s32 %v668, %v826
        %v828 = vrot.slane %v801, %v827
        %v829 = vlaneseq
        %v830 = vshrl.u32 %v829, 7
        %v831 = vsub.s32 %v668, %v830
        %v832 = vrot.slane %v804, %v831
        %v833 = vlaneseq
        %v834 = vshrl.u32 %v833, 7
        %v835 = vsub.s32 %v668, %v834
        %v836 = vrot.slane %v807, %v835
        %v837 = vlaneseq
        %v838 = vshrl.u32 %v837, 7
        %v839 = vsub.s32 %v668, %v838
        %v840 = vrot.slane %v810, %v839
        %v841 = vlaneseq
        %v842 = vshrl.u32 %v841, 7
        %v843 = vsub.s32 %v668, %v842
        %v844 = vrot.slane %v813, %v843
        %v845 = vlaneseq
        %v846 = vshrl.u32 %v845, 7
        %v847 = vsub.s32 %v668, %v846
        %v848 = vrot.slane %v816, %v847
        %v849 = vsel %vm701, %v824, %v820
        %v850 = vsel %vm703, %v828, %v849
        %v851 = vsel %vm705, %v832, %v850
        %v852 = vsel %vm707, %v836, %v851
        %v853 = vsel %vm709, %v840, %v852
        %v854 = vsel %vm711, %v844, %v853
        %v855 = vsel %vm713, %v848, %v854
        %v857 = vsel %vm716, %v855, 0.0
        %858 = vadd.xlane.f32.xlu0 %v857
        %v859 = vpop.xlane.xlu0 %858
        %v861 = vlaneseq
        %v862 = vshrl.u32 %v861, 7
        %v863 = vsub.s32 0, %v862
        %v864 = vrot.slane %v859, %v863
        %v865 = vlaneseq
        %v866 = vshrl.u32 %v865, 7
        %v867 = vsub.s32 1, %v866
        %v868 = vrot.slane %v859, %v867
        %v869 = vlaneseq
        %v870 = vshrl.u32 %v869, 7
        %v871 = vsub.s32 2, %v870
        %v872 = vrot.slane %v859, %v871
        %v873 = vlaneseq
        %v874 = vshrl.u32 %v873, 7
        %v875 = vsub.s32 3, %v874
        %v876 = vrot.slane %v859, %v875
        %v877 = vlaneseq
        %v878 = vshrl.u32 %v877, 7
        %v879 = vsub.s32 4, %v878
        %v880 = vrot.slane %v859, %v879
        %v881 = vlaneseq
        %v882 = vshrl.u32 %v881, 7
        %v883 = vsub.s32 5, %v882
        %v884 = vrot.slane %v859, %v883
        %v885 = vlaneseq
        %v886 = vshrl.u32 %v885, 7
        %v887 = vsub.s32 6, %v886
        %v888 = vrot.slane %v859, %v887
        %v889 = vlaneseq
        %v890 = vshrl.u32 %v889, 7
        %v891 = vsub.s32 7, %v890
        %v892 = vrot.slane %v859, %v891
        %v901 = vrcp.pop %v864
        %v902 = vmul.f32 %v770, %v901
        %v903 = vrcp.pop %v868
        %v904 = vmul.f32 %v772, %v903
        %v905 = vrcp.pop %v872
        %v906 = vmul.f32 %v774, %v905
        %v907 = vrcp.pop %v876
        %v908 = vmul.f32 %v776, %v907
        %v909 = vrcp.pop %v880
        %v910 = vmul.f32 %v778, %v909
        %v911 = vrcp.pop %v884
        %v912 = vmul.f32 %v780, %v911
        %v913 = vrcp.pop %v888
        %v914 = vmul.f32 %v782, %v913
        %v915 = vrcp.pop %v892
        %v916 = vmul.f32 %v784, %v915
        %918 = vset.pattern.permute.xlu0 0
        %919 = vperm.xlu0 %918, %v902
        %v920 = vpop.permute.xlu0 %919
        %923 = vset.pattern.permute.xlu0 0
        %924 = vperm.xlu0 %923, %v904
        %v925 = vpop.permute.xlu0 %924
        %928 = vset.pattern.permute.xlu0 0
        %929 = vperm.xlu0 %928, %v906
        %v930 = vpop.permute.xlu0 %929
        %933 = vset.pattern.permute.xlu0 0
        %934 = vperm.xlu0 %933, %v908
        %v935 = vpop.permute.xlu0 %934
        %938 = vset.pattern.permute.xlu0 0
        %939 = vperm.xlu0 %938, %v910
        %v940 = vpop.permute.xlu0 %939
        %943 = vset.pattern.permute.xlu0 0
        %944 = vperm.xlu0 %943, %v912
        %v945 = vpop.permute.xlu0 %944
        %948 = vset.pattern.permute.xlu0 0
        %949 = vperm.xlu0 %948, %v914
        %v950 = vpop.permute.xlu0 %949
        %953 = vset.pattern.permute.xlu0 0
        %954 = vperm.xlu0 %953, %v916
        %v955 = vpop.permute.xlu0 %954
        %v957 = vmul.f32 %v315, %v920
        %v958 = vmul.f32 %v316, %v925
        %v959 = vmul.f32 %v317, %v930
        %v960 = vmul.f32 %v318, %v935
        %v961 = vmul.f32 %v319, %v940
        %v962 = vmul.f32 %v320, %v945
        %v963 = vmul.f32 %v321, %v950
        %v964 = vmul.f32 %v322, %v955
        %v965 = vrot.slane %v957, 4
        %v966 = vadd.f32 %v957, %v965
        %v967 = vrot.slane %v966, 2
        %v968 = vadd.f32 %v966, %v967
        %v969 = vrot.slane %v968, 1
        %v970 = vadd.f32 %v968, %v969
        %v971 = vrot.slane %v958, 4
        %v972 = vadd.f32 %v958, %v971
        %v973 = vrot.slane %v972, 2
        %v974 = vadd.f32 %v972, %v973
        %v975 = vrot.slane %v974, 1
        %v976 = vadd.f32 %v974, %v975
        %v977 = vrot.slane %v959, 4
        %v978 = vadd.f32 %v959, %v977
        %v979 = vrot.slane %v978, 2
        %v980 = vadd.f32 %v978, %v979
        %v981 = vrot.slane %v980, 1
        %v982 = vadd.f32 %v980, %v981
        %v983 = vrot.slane %v960, 4
        %v984 = vadd.f32 %v960, %v983
        %v985 = vrot.slane %v984, 2
        %v986 = vadd.f32 %v984, %v985
        %v987 = vrot.slane %v986, 1
        %v988 = vadd.f32 %v986, %v987
        %v989 = vrot.slane %v961, 4
        %v990 = vadd.f32 %v961, %v989
        %v991 = vrot.slane %v990, 2
        %v992 = vadd.f32 %v990, %v991
        %v993 = vrot.slane %v992, 1
        %v994 = vadd.f32 %v992, %v993
        %v995 = vrot.slane %v962, 4
        %v996 = vadd.f32 %v962, %v995
        %v997 = vrot.slane %v996, 2
        %v998 = vadd.f32 %v996, %v997
        %v999 = vrot.slane %v998, 1
        %v1000 = vadd.f32 %v998, %v999
        %v1001 = vrot.slane %v963, 4
        %v1002 = vadd.f32 %v963, %v1001
        %v1003 = vrot.slane %v1002, 2
        %v1004 = vadd.f32 %v1002, %v1003
        %v1005 = vrot.slane %v1004, 1
        %v1006 = vadd.f32 %v1004, %v1005
        %v1007 = vrot.slane %v964, 4
        %v1008 = vadd.f32 %v964, %v1007
        %v1009 = vrot.slane %v1008, 2
        %v1010 = vadd.f32 %v1008, %v1009
        %v1011 = vrot.slane %v1010, 1
        %v1012 = vadd.f32 %v1010, %v1011
        %v1021 = vsel %vm701, %v976, %v970
        %v1022 = vsel %vm703, %v982, %v1021
        %v1023 = vsel %vm705, %v988, %v1022
        %v1024 = vsel %vm707, %v994, %v1023
        %v1025 = vsel %vm709, %v1000, %v1024
        %v1026 = vsel %vm711, %v1006, %v1025
        %v1027 = vsel %vm713, %v1012, %v1026
        %1029 = vst [vmem:[%s313] sm:$0xff] %v1027
        %s1030 = sand.u32 %s187, 1
        %s1031 = scalar_lea.sflag [#allocation5], %s1030
        %s1032 = sand.u32 %s187, 1
        %s1033 = smul.addr %s1032, 8
        %s1034 = scalar_lea.vmem [#allocation8], %s1033
        // Predicated region
        $region57: #{attention_pooling.1} parent=47 // pred_check
          %p1035 = pneg %p197
        $region58: #{attention_pooling.1} parent=47 // pred_check_branch
          %1037 = sbr.rel (%p1035) target = $region60
        $region59: #{attention_pooling.1} parent=47 // pred_region
          %s1039 = ssub.s32 128, 128
          %1040 = vsyncadd %s1031, %s1039
          %s1041 = smul.addr %s27, 128
          %s1042 = scalar_lea.hbm %s7, %s1041
          %s1044 = sshll.u32 %s1034, 4
          %s1045 = int_to_ptr.vmem [resolvable:$true] %s1044
          %1047 = dma.vmem_to_hbm [thread:$0]  %s1045, 128, %s1042, %s1031
        $region60: #{attention_pooling.1} parent=47 // pred_fallthru
          _
      $region48: #{attention_pooling.1} parent=5 // pred_fallthru
        _
      %p1048 = scmp.le.s32.totalorder 2, %s22
      // Predicated region
      $region61: #{attention_pooling.1} parent=5 // pred_check
        %p1049 = pneg %p1048
      $region62: #{attention_pooling.1} parent=5 // pred_check_branch
        %1051 = sbr.rel (%p1049) target = $region64
      $region63: #{attention_pooling.1} parent=5 // pred_region
        %s1052 = ssub.s32 %s22, 2
        // Predicated region
        $region65: #{attention_pooling.1} parent=63 // pred_check
          %p1053 = pneg %p203
        $region66: #{attention_pooling.1} parent=63 // pred_check_branch
          %1055 = sbr.rel (%p1053) target = $region68
        $region67: #{attention_pooling.1} parent=63 // pred_region
          %s1056 = sand.u32 %s188, 1
          %s1057 = scalar_lea.sflag [#allocation5], %s1056
          %s1058 = sand.u32 %s188, 1
          %s1059 = smul.addr %s1058, 8
          %s1060 = scalar_lea.vmem [#allocation8], %s1059
          %1061 = dma.done %s1057, 128
        $region68: #{attention_pooling.1} parent=63 // pred_fallthru
          _
      $region64: #{attention_pooling.1} parent=5 // pred_fallthru
        _
    $region6: #{attention_pooling.1} parent=1 // loop_footer
      %s26 = sadd.s32 1, %s22
    $region7: #{attention_pooling.1} parent=1 // loop_footer_branch
      %21 = sbr.rel target = $region3
    $region8: #{attention_pooling.1} parent=1 // loop_exit
      _
    %1062 = vsyncpa [#allocation4], 1
    %s1063 = scalar_lea.sflag [#allocation4], 1
    %1064 = vsyncpa %s1063, 1
    %1065 = vsyncpa [#allocation7], 1
    %1066 = vsyncpa [#allocation5], 1
    %s1067 = scalar_lea.sflag [#allocation5], 1
    %1068 = vsyncpa %s1067, 1

</llo_original>
